<compile_context>
chip_gen: v7x
topology: tpu7x:2x2x1
jax: 0.10.0
libtpu: 0.0.40
codegen_flags: <defaults>
</compile_context>

<pallas_src>
import functools
import math

import jax
import jax.numpy as jnp
from jax.experimental import pallas as pl
from jax.experimental.pallas import tpu as pltpu


def _round_up(x, m):
    return ((x + m - 1) // m) * m


def _softplus(x):
    # Matches torch.nn.Softplus(beta=1, threshold=20): identity for x > 20.
    # min() keeps exp() from overflowing on the "identity" branch.
    return jnp.where(x > 20.0, x, jnp.log1p(jnp.exp(jnp.minimum(x, 20.0))))


def forced_positive_kernel(x_ref, wt_ref, o_ref, *, add_eps, eps):
    # Pure MXU matmul tile: softplus was precomputed in the wrapper, and the
    # f32 output block is resident across the k axis (acts as the accumulator).
    k = pl.program_id(2)

    @pl.when(k == 0)
    def _():
        o_ref[...] = jnp.zeros_like(o_ref)

    o_ref[...] += jnp.dot(x_ref[...], wt_ref[...],
                          preferred_element_type=jnp.float32)

    if add_eps:
        @pl.when(k == pl.num_programs(2) - 1)
        def _():
            o_ref[...] += eps  # fused epilogue: VPU has slack under the MXU


def forced_positive_forward(x, weight, *, training=False, eps=1e-8,
                            operand_dtype=jnp.float32,
                            tm_max=512, tn_max=512, tk_max=2048):
    """x: (B, in_features), weight: (num_classes, in_features)."""
    B, K = x.shape
    N, K2 = weight.shape
    assert K == K2

    # Tile sizes: 8/128-aligned, capped so double-buffered operand tiles plus
    # the resident output tile stay well under v7x's 32 MiB scoped default.
    tm = min(_round_up(B, 8), tm_max)
    tn = min(_round_up(N, 128), tn_max)
    tk = min(_round_up(K, 128), tk_max)

    Bp = _round_up(B, tm)
    Np = _round_up(N, tn)
    Kp = _round_up(K, tk)

    # v7x megacore heuristic: if the whole problem is a single (i, j) tile,
    # split the class axis (preferred) or the batch so both TensorCores get a
    # parallel grid step.  No-op (and irrelevant) on v5e/v6e and tiny shapes.
    if (Bp // tm) * (Np // tn) < 2:
        np_min = _round_up(N, 128)
        bp_min = _round_up(B, 8)
        if np_min >= 256:
            tn = np_min // 2 if (np_min // 2) % 128 == 0 else 128
            Np = _round_up(N, tn)
        elif bp_min >= 16:
            tm = bp_min // 2 if (bp_min // 2) % 8 == 0 else 8
            Bp = _round_up(B, tm)

    gi, gj, gk = Bp // tm, Np // tn, Kp // tk

    # Hoisted softplus: one fused elementwise + transpose + pad pass per
    # operand in the wrapper (HBM-bandwidth bound, not EUP-slot bound).
    # Zero padding contributes nothing to the contraction.
    x_sp = _softplus(x.astype(jnp.float32))
    if (Bp, Kp) != (B, K):
        x_sp = jnp.pad(x_sp, ((0, Bp - B), (0, Kp - K)))
    x_sp = x_sp.astype(operand_dtype)

    wt_sp = _softplus(weight.astype(jnp.float32)).T  # (K, N): contract on K
    if (Kp, Np) != (K, N):
        wt_sp = jnp.pad(wt_sp, ((0, Kp - K), (0, Np - N)))
    wt_sp = wt_sp.astype(operand_dtype)

    ibytes = jnp.dtype(operand_dtype).itemsize
    # Double-buffered operand tiles + resident/double-buffered f32 output tile.
    vmem_bytes = 2 * (tm * tk + tk * tn) * ibytes + 2 * tm * tn * 4
    vmem_limit = min(64 << 20, max(2 * vmem_bytes, 32 << 20))  # v7x-safe cap

    kernel = functools.partial(
        forced_positive_kernel, add_eps=bool(training), eps=float(eps))

    cost = pl.CostEstimate(
        flops=2 * Bp * Np * Kp,
        transcendentals=0,  # softplus now lives in the wrapper
        bytes_accessed=ibytes * (Bp * Kp * gj + Kp * Np * gi) + 4 * Bp * Np,
    )

    ret = pl.pallas_call(
        kernel,
        out_shape=jax.ShapeDtypeStruct((Bp, Np), jnp.float32),
        grid_spec=pltpu.PrefetchScalarGridSpec(
            num_scalar_prefetch=0,
            grid=(gi, gj, gk),
            in_specs=[
                pl.BlockSpec((tm, tk), lambda i, j, k: (i, k)),
                pl.BlockSpec((tk, tn), lambda i, j, k: (k, j)),
            ],
            out_specs=pl.BlockSpec((tm, tn), lambda i, j, k: (i, j)),
        ),
        compiler_params=pltpu.CompilerParams(
            dimension_semantics=("parallel", "parallel", "arbitrary"),
            vmem_limit_bytes=int(vmem_limit),
        ),
        cost_estimate=cost,
    )(x_sp, wt_sp)

    if (Bp, Np) != (B, N):
        ret = ret[:B, :N]

    if training:
        return ret  # eps already fused into the kernel epilogue
    return (ret, 0, 0)


def init_forced_positive_params(key, in_features, num_classes):
    # kaiming_normal_(nonlinearity='relu'): std = sqrt(2 / fan_in), fan_in = in_features.
    wkey, _ = jax.random.split(key)
    std = math.sqrt(2.0 / in_features)
    weight = std * jax.random.normal(wkey, (num_classes, in_features), dtype=jnp.float32)
    bias = jnp.ones((num_classes,), dtype=jnp.float32)  # init'd like the module; unused in forward
    return weight, bias


if __name__ == "__main__":
    B, in_features, num_classes = 8, 32, 16

    key = jax.random.PRNGKey(0)
    kx, kp = jax.random.split(key)
    x = jax.random.normal(kx, (B, in_features), dtype=jnp.float32)
    weight, bias = init_forced_positive_params(kp, in_features, num_classes)

    # Eval path.
    ret, z0, z1 = forced_positive_forward(x, weight, training=False)
    ret = jax.block_until_ready(ret)

    # Training path (eps fused in-kernel).
    ret_train = jax.block_until_ready(
        forced_positive_forward(x, weight, training=True))

    # Pure-JAX reference check (f32 operand path must match within 1e-4).
    ref = jnp.dot(jax.nn.softplus(x), jax.nn.softplus(weight).T)
    assert ret.shape == (B, num_classes)
    assert jnp.allclose(ret, ref, atol=1e-4, rtol=1e-4), "eval mismatch vs reference"
    assert jnp.allclose(ret_train, ref + 1e-8, atol=1e-4, rtol=1e-4), \
        "training mismatch vs reference"
    assert z0 == 0 and z1 == 0

    print("KERNEL_OK")
</pallas_src>

<mosaic_0001>
module attributes {stable_mosaic.version = 11 : i64} {
  func.func @forced_positive_kernel(%arg0: i32, %arg1: i32, %arg2: i32, %arg3: memref<8x128xf32, #tpu.memory_space<vmem>>, %arg4: memref<128x128xf32, #tpu.memory_space<vmem>>, %arg5: memref<8x128xf32, #tpu.memory_space<vmem>>) attributes {dimension_semantics = [#tpu.dimension_semantics<parallel>, #tpu.dimension_semantics<parallel>, #tpu.dimension_semantics<arbitrary>], iteration_bounds = array<i64: 1, 1, 1>, scalar_prefetch = 0 : i64, scratch_operands = 0 : i64, tpu.core_type = #tpu.core_type<tc>, window_params = [{transform_indices = @transform_0, window_bounds = array<i64: 8, 128>}, {transform_indices = @transform_1, window_bounds = array<i64: 128, 128>}, {transform_indices = @transform_2, window_bounds = array<i64: 8, 128>}]} {
    %c0_i32 = arith.constant 0 : i32
    %0 = arith.cmpi eq, %arg2, %c0_i32 : i32
    %1 = arith.extui %0 : i1 to i32
    %c0_i32_0 = arith.constant 0 : i32
    %2 = arith.cmpi ne, %1, %c0_i32_0 : i32
    scf.if %2 {
      %cst_8 = arith.constant 0.000000e+00 : f32
      %9 = vector.broadcast %cst_8 : f32 to vector<8x128xf32>
      %c0_9 = arith.constant 0 : index
      %c0_10 = arith.constant 0 : index
      %10 = vector.load %arg5[%c0_9, %c0_10] : memref<8x128xf32, #tpu.memory_space<vmem>>, vector<8x128xf32>
      tpu.vector_store %arg5[%c0_9, %c0_10], %9 {strides = array<i32>} : memref<8x128xf32, #tpu.memory_space<vmem>>, vector<8x128xf32>,
    } else {
    }
    %c0 = arith.constant 0 : index
    %c0_1 = arith.constant 0 : index
    %3 = vector.load %arg5[%c0, %c0_1] : memref<8x128xf32, #tpu.memory_space<vmem>>, vector<8x128xf32>
    %c0_2 = arith.constant 0 : index
    %c0_3 = arith.constant 0 : index
    %4 = vector.load %arg3[%c0_2, %c0_3] : memref<8x128xf32, #tpu.memory_space<vmem>>, vector<8x128xf32>
    %c0_4 = arith.constant 0 : index
    %c0_5 = arith.constant 0 : index
    %5 = vector.load %arg4[%c0_4, %c0_5] : memref<128x128xf32, #tpu.memory_space<vmem>>, vector<128x128xf32>
    %cst = arith.constant dense<0.000000e+00> : vector<8x128xf32>
    %6 = tpu.matmul %4, %5, %cst {dimension_numbers = #tpu.dot_dimension_numbers<[1], [0], [0], [1], [0, 0, 1, 1], [], []>} : vector<8x128xf32>, vector<128x128xf32>, vector<8x128xf32> -> vector<8x128xf32>
    %7 = arith.addf %3, %6 : vector<8x128xf32>
    %c0_6 = arith.constant 0 : index
    %c0_7 = arith.constant 0 : index
    %8 = vector.load %arg5[%c0_6, %c0_7] : memref<8x128xf32, #tpu.memory_space<vmem>>, vector<8x128xf32>
    tpu.vector_store %arg5[%c0_6, %c0_7], %7 {strides = array<i32>} : memref<8x128xf32, #tpu.memory_space<vmem>>, vector<8x128xf32>,
    return
  }
  func.func @transform_0(%arg0: i32, %arg1: i32, %arg2: i32) -> (i32, i32) {
    %c0_i32 = arith.constant 0 : i32
    return %arg0, %arg2 : i32, i32
  }
  func.func @transform_1(%arg0: i32, %arg1: i32, %arg2: i32) -> (i32, i32) {
    %c0_i32 = arith.constant 0 : i32
    return %arg2, %arg1 : i32, i32
  }
  func.func @transform_2(%arg0: i32, %arg1: i32, %arg2: i32) -> (i32, i32) {
    %c0_i32 = arith.constant 0 : i32
    return %arg0, %arg1 : i32, i32
  }
}

</mosaic_0001>

<llo_original>
// kernel: tpu_custom_call.1
$region0: #{tpu_custom_call.1}
  #allocation0 [shape = 'u32[]', space=smem, size = 0x4, offset = 0x4, fixed_abs, tag = 'smem constant byte address 0x4 - core index']
  #allocation1 [shape = 'u32[144,128]{1,0:T(1,128)}', space=vmem, size = 0x12000, scoped, tag = 'internal scratch']
  %s0 = inlined_call_operand.hbm [shape: f32[8,128], index: 0, kind: input, shape index: {}]
  %s1 = inlined_call_operand.hbm [shape: f32[128,128], index: 1, kind: input, shape index: {}]
  %s2 = inlined_call_operand.hbm [shape: f32[8,128], index: 2, kind: output, shape index: {}]
  %s3 = sld [smem:[#allocation0]]
  $region30: #{tpu_custom_call.1} parent=0
    _
  %s5 = ssub.s32 1, %s3
  %s6 = scalar_select 0, %s5, %s3
  $region1: #{tpu_custom_call.1} parent=0
    #allocation2 [shape = 'u8[4096]{0}', space=vmem, size = 0x1000, scoped, tag = 'input window, operand 0, single buffered']
    #allocation3 [shape = 's32[1]{0}', space=sflag, size = 0x4, scoped, tag = 'scoped memory for tpu_custom_call.1']
    #allocation4 [shape = 's32[1]{0}', space=sflag, size = 0x4, scoped, tag = 'scoped memory for tpu_custom_call.1']
    #allocation5 [shape = 'u8[65536]{0}', space=vmem, size = 0x10000, scoped, tag = 'input window, operand 1, single buffered']
    #allocation6 [shape = 's32[1]{0}', space=sflag, size = 0x4, scoped, tag = 'scoped memory for tpu_custom_call.1']
    #allocation7 [shape = 'u8[4096]{0}', space=vmem, size = 0x1000, scoped, tag = 'output window, operand 0, single buffered']
    %7 = vsyncpa [#allocation3], 0
    %8 = vsyncpa [#allocation6], 0
    %9 = vsyncpa [#allocation4], 0
    // Predicated region
    $region2: #{tpu_custom_call.1} parent=1 // pred_check
      _
    $region3: #{tpu_custom_call.1} parent=1 // pred_check_branch
      %11 = sbr.rel (0) target = $region5
    $region4: #{tpu_custom_call.1} parent=1 // pred_region
      %s13 = ssub.s32 128, 128
      %14 = vsyncadd [#allocation3], %s13
      %s16 = sshll.u32 [#allocation2], 4
      %s17 = int_to_ptr.vmem [resolvable:$true] %s16
      %19 = dma.hbm_to_vmem [thread:$0]  %s0, 128, %s17, [#allocation3]
    $region5: #{tpu_custom_call.1} parent=1 // pred_fallthru
      _
    // Predicated region
    $region6: #{tpu_custom_call.1} parent=1 // pred_check
      _
    $region7: #{tpu_custom_call.1} parent=1 // pred_check_branch
      %21 = sbr.rel (0) target = $region9
    $region8: #{tpu_custom_call.1} parent=1 // pred_region
      %s23 = ssub.s32 2048, 2048
      %24 = vsyncadd [#allocation6], %s23
      %s25 = sshll.u32 [#allocation5], 4
      %s26 = int_to_ptr.vmem [resolvable:$true] %s25
      %31 = dma.hbm_to_vmem [thread:$0]  %s1, 2048, %s26, [#allocation6], 128, 128, 8
    $region9: #{tpu_custom_call.1} parent=1 // pred_fallthru
      _
    // Predicated region
    $region10: #{tpu_custom_call.1} parent=1 // pred_check
      _
    $region11: #{tpu_custom_call.1} parent=1 // pred_check_branch
      %33 = sbr.rel (0) target = $region13
    $region12: #{tpu_custom_call.1} parent=1 // pred_region
      %34 = dma.done [#allocation3], 128
    $region13: #{tpu_custom_call.1} parent=1 // pred_fallthru
      _
    // Predicated region
    $region14: #{tpu_custom_call.1} parent=1 // pred_check
      _
    $region15: #{tpu_custom_call.1} parent=1 // pred_check_branch
      %36 = sbr.rel (0) target = $region17
    $region16: #{tpu_custom_call.1} parent=1 // pred_region
      %37 = dma.done [#allocation6], 2048
    $region17: #{tpu_custom_call.1} parent=1 // pred_fallthru
      _
    %p38 = scmp.eq.s32.totalorder 0, 0
    // Predicated region
    $region18: #{tpu_custom_call.1} parent=1 // pred_check
      %p39 = pneg %p38
    $region19: #{tpu_custom_call.1} parent=1 // pred_check_branch
      %41 = sbr.rel (%p39) target = $region21
    $region20: #{tpu_custom_call.1} parent=1 // pred_region
      %42 = vst [vmem:[#allocation7] sm:$0xff] 0.0
    $region21: #{tpu_custom_call.1} parent=1 // pred_fallthru
      _
    %v43 = vld [vmem:[#allocation7] sm:$0xff]
    %v44 = vld [vmem:[#allocation2] sm:$0xff]
    %v45 = vld [vmem:[#allocation5] sm:$0xff]
    %v46 = vld [vmem:[#allocation5 + $0x8] sm:$0xff]
    %v47 = vld [vmem:[#allocation5 + $0x10] sm:$0xff]
    %v48 = vld [vmem:[#allocation5 + $0x18] sm:$0xff]
    %v49 = vld [vmem:[#allocation5 + $0x20] sm:$0xff]
    %v50 = vld [vmem:[#allocation5 + $0x28] sm:$0xff]
    %v51 = vld [vmem:[#allocation5 + $0x30] sm:$0xff]
    %v52 = vld [vmem:[#allocation5 + $0x38] sm:$0xff]
    %v53 = vld [vmem:[#allocation5 + $0x40] sm:$0xff]
    %v54 = vld [vmem:[#allocation5 + $0x48] sm:$0xff]
    %v55 = vld [vmem:[#allocation5 + $0x50] sm:$0xff]
    %v56 = vld [vmem:[#allocation5 + $0x58] sm:$0xff]
    %v57 = vld [vmem:[#allocation5 + $0x60] sm:$0xff]
    %v58 = vld [vmem:[#allocation5 + $0x68] sm:$0xff]
    %v59 = vld [vmem:[#allocation5 + $0x70] sm:$0xff]
    %v60 = vld [vmem:[#allocation5 + $0x78] sm:$0xff]
    %61 = vmatprep.subr.mxu0 0.0
    %62 = vmatpush1.msra.mxu0 %v45
    %63 = vmatprep.subr.mxu0 0.0
    %64 = vmatpush1.msra.mxu0 %v46
    %65 = vmatprep.subr.mxu0 0.0
    %66 = vmatpush1.msra.mxu0 %v47
    %67 = vmatprep.subr.mxu0 0.0
    %68 = vmatpush1.msra.mxu0 %v48
    %69 = vmatprep.subr.mxu0 0.0
    %70 = vmatpush1.msra.mxu0 %v49
    %71 = vmatprep.subr.mxu0 0.0
    %72 = vmatpush1.msra.mxu0 %v50
    %73 = vmatprep.subr.mxu0 0.0
    %74 = vmatpush1.msra.mxu0 %v51
    %75 = vmatprep.subr.mxu0 0.0
    %76 = vmatpush1.msra.mxu0 %v52
    %77 = vmatprep.subr.mxu0 0.0
    %78 = vmatpush1.msra.mxu0 %v53
    %79 = vmatprep.subr.mxu0 0.0
    %80 = vmatpush1.msra.mxu0 %v54
    %81 = vmatprep.subr.mxu0 0.0
    %82 = vmatpush1.msra.mxu0 %v55
    %83 = vmatprep.subr.mxu0 0.0
    %84 = vmatpush1.msra.mxu0 %v56
    %85 = vmatprep.subr.mxu0 0.0
    %86 = vmatpush1.msra.mxu0 %v57
    %87 = vmatprep.subr.mxu0 0.0
    %88 = vmatpush1.msra.mxu0 %v58
    %89 = vmatprep.subr.mxu0 0.0
    %90 = vmatpush1.msra.mxu0 %v59
    %91 = vmatprep.subr.mxu0 0.0
    %92 = vmatpush1.msra.mxu0 %v60
    %93 = vmatprep.subr.mxu0 0.0
    %94 = vmatpush1.msra.mxu0 0.0
    %95 = vmatprep.subr.mxu0 0.0
    %96 = vmatpush1.msra.mxu0 0.0
    %97 = vmatprep.subr.mxu0 0.0
    %98 = vmatpush1.msra.mxu0 0.0
    %99 = vmatprep.subr.mxu0 0.0
    %100 = vmatpush1.msra.mxu0 0.0
    %101 = vmatprep.subr.mxu0 0.0
    %102 = vmatpush1.msra.mxu0 0.0
    %103 = vmatprep.subr.mxu0 0.0
    %104 = vmatpush1.msra.mxu0 0.0
    %105 = vmatprep.subr.mxu0 0.0
    %106 = vmatpush1.msra.mxu0 0.0
    %107 = vmatprep.subr.mxu0 0.0
    %108 = vmatpush1.msra.mxu0 0.0
    %109 = vmatprep.subr.mxu0 0.0
    %110 = vmatpush1.msra.mxu0 0.0
    %111 = vmatprep.subr.mxu0 0.0
    %112 = vmatpush1.msra.mxu0 0.0
    %113 = vmatprep.subr.mxu0 0.0
    %114 = vmatpush1.msra.mxu0 0.0
    %115 = vmatprep.subr.mxu0 0.0
    %116 = vmatpush1.msra.mxu0 0.0
    %117 = vmatprep.subr.mxu0 0.0
    %118 = vmatpush1.msra.mxu0 0.0
    %119 = vmatprep.subr.mxu0 0.0
    %120 = vmatpush1.msra.mxu0 0.0
    %121 = vmatprep.subr.mxu0 0.0
    %122 = vmatpush1.msra.mxu0 0.0
    %123 = vmatprep.subr.mxu0 0.0
    %124 = vmatpush1.msra.mxu0 0.0
    %125 = vmatprep.mubr.f32.mxu0 0.0
    %126 = vmatmul.mubr.f32.gmra.mrb[0].mxu0 %v44
    %v127 = vpop.f32.mrb[0].mxu0
    %v128 = vadd.f32 0.0, %v127
    %v129 = vpop.f32.mrb[0].mxu0
    %130 = vdwg.mxu0
    %v131 = vadd.f32 %v43, %v128
    %132 = vst [vmem:[#allocation7] sm:$0xff] %v131
    // Predicated region
    $region22: #{tpu_custom_call.1} parent=1 // pred_check
      _
    $region23: #{tpu_custom_call.1} parent=1 // pred_check_branch
      %134 = sbr.rel (0) target = $region25
    $region24: #{tpu_custom_call.1} parent=1 // pred_region
      %s136 = ssub.s32 128, 128
      %137 = vsyncadd [#allocation4], %s136
      %s139 = sshll.u32 [#allocation7], 4
      %s140 = int_to_ptr.vmem [resolvable:$true] %s139
      %142 = dma.vmem_to_hbm [thread:$0]  %s140, 128, %s2, [#allocation4]
    $region25: #{tpu_custom_call.1} parent=1 // pred_fallthru
      _
    // Predicated region
    $region26: #{tpu_custom_call.1} parent=1 // pred_check
      _
    $region27: #{tpu_custom_call.1} parent=1 // pred_check_branch
      %144 = sbr.rel (0) target = $region29
    $region28: #{tpu_custom_call.1} parent=1 // pred_region
      %145 = dma.done [#allocation4], 128
    $region29: #{tpu_custom_call.1} parent=1 // pred_fallthru
      _
    %146 = vsyncpa [#allocation3], 1
    %147 = vsyncpa [#allocation6], 1
    %148 = vsyncpa [#allocation4], 1

</llo_original>
